<compile_context>
chip_gen: v7x
topology: tpu7x:2x2x1
jax: 0.10.0
libtpu: 0.0.40
codegen_flags: <defaults>
</compile_context>

<pallas_src>
import math

import jax
import jax.numpy as jnp
from jax.experimental import pallas as pl
from jax.experimental.pallas import tpu as pltpu


# Outputs smaller than this skip Pallas entirely (launch overhead dominates).
_SMALL_FAST_PATH_BYTES = 1 << 20  # 1 MiB


def _broadcast_kernel(table_ref, out_ref):
    # table_ref: (1, W) float32 in VMEM -- flattened (possibly P-packed) table
    # out_ref  : (TB, W) float32        -- TB packed batch rows
    out_ref[...] = jnp.broadcast_to(table_ref[...], out_ref.shape)


def _pick_block_rows(rows, row_bytes, per_buffer_budget):
    """Choose output block rows: VMEM-budget aware, tiling-rule safe, >=2 grid
    steps when there are enough rows (dual-TC on v7x)."""
    if rows <= 8:
        return rows  # full-extent block satisfies the tiling rule
    tb = max(per_buffer_budget // max(row_bytes, 1), 8)
    tb = (tb // 8) * 8  # sublane multiple
    if rows >= 16:
        half = -(-rows // 2)              # cdiv(rows, 2)
        half = ((half + 7) // 8) * 8      # round up to multiple of 8
        tb = min(tb, half)                # -> at least 2 grid steps
    if tb >= rows:
        return rows
    return max(tb, 8)


def label_embedding_forward(batch_num, table, *, force_pallas=False):
    """Pallas equivalent of LabelEmbedding.forward(batch_num).

    table: (num_labels, hidden) float32 embedding weight.
    Returns (batch_num, num_labels, hidden) float32.

    NOTE: valid only because label indices are always arange(num_labels); if
    the module ever passes arbitrary labels this shortcut no longer applies.
    """
    L, H = table.shape
    LH = L * H
    dtype = table.dtype
    itemsize = jnp.dtype(dtype).itemsize

    total_bytes = batch_num * LH * itemsize
    if (not force_pallas) and total_bytes < _SMALL_FAST_PATH_BYTES:
        # Tiny output: let XLA fuse the broadcast into the consumer.
        return jnp.broadcast_to(table[None, :, :], (batch_num, L, H))

    # ---- Lane-dense packing -------------------------------------------------
    # Pack P batch rows into one output row of width W = LH * P so the output
    # last dim is a multiple of 128 lanes (unmasked stores, dense HBM layout).
    lane = 128
    P = lane // math.gcd(LH, lane)
    if P > 1 and batch_num % P != 0:
        P = 1  # fall back to unpacked rows (masked stores, still correct)
    W = LH * P
    rows = batch_num // P

    table_row = table.reshape(1, LH)
    if P > 1:
        table_row = jnp.tile(table_row, (1, P))  # (1, W): P copies of the table

    # ---- VMEM-budget-aware output block ------------------------------------
    # Output is double-buffered by the pipeline; cap each buffer at ~6 MiB so
    # 2x out-buffers + the sublane-padded table block stay well under the
    # v7x 64 MiB physical VMEM (and comfortably inside v5e/v6e budgets).
    per_buffer_budget = 6 * (1 << 20)
    row_bytes = W * itemsize
    tb = _pick_block_rows(rows, row_bytes, per_buffer_budget)
    grid = (pl.cdiv(rows, tb),)

    table_block_bytes = 8 * W * itemsize  # (1, W) block pads sublanes to 8
    vmem_need = 2 * tb * row_bytes + 2 * table_block_bytes
    vmem_limit = int(min(max(vmem_need + (2 << 20), 16 << 20), 48 << 20))

    out2d = pl.pallas_call(
        _broadcast_kernel,
        out_shape=jax.ShapeDtypeStruct((rows, W), dtype),
        grid=grid,
        in_specs=[
            # Embedding table row, same block every step (stays resident).
            pl.BlockSpec((1, W), lambda b: (0, 0)),
        ],
        # Lane-dense output slab: TB packed rows x W lanes per grid step.
        out_specs=pl.BlockSpec((tb, W), lambda b: (b, 0)),
        compiler_params=pltpu.CompilerParams(
            dimension_semantics=("parallel",),
            vmem_limit_bytes=vmem_limit,
        ),
    )(table_row)

    # Row-major reshape (rows, L*H*P) -> (batch_num, L, H) is layout-preserving.
    return out2d.reshape(batch_num, L, H)


def _reference(batch_num, table):
    L, H = table.shape
    labels = jnp.arange(L, dtype=jnp.int32)
    return jnp.broadcast_to(table[labels][None, :, :], (batch_num, L, H))


if __name__ == "__main__":
    num_labels = 3
    hidden = 32
    batch_num = 2

    key = jax.random.PRNGKey(0)
    # nn.Embedding default init: N(0, 1)
    table = jax.random.normal(key, (num_labels, hidden), dtype=jnp.float32)

    # 1) Default path at the module's tiny shape -> fast (non-Pallas) path.
    out_fast = jax.block_until_ready(label_embedding_forward(batch_num, table))
    ref = _reference(batch_num, table)
    assert out_fast.shape == (batch_num, num_labels, hidden)
    assert jnp.allclose(out_fast, ref, atol=1e-6), "fast path mismatch"

    # 2) Force the Pallas kernel at the same tiny shape (P falls back to 1).
    out_pl = jax.block_until_ready(
        label_embedding_forward(batch_num, table, force_pallas=True))
    assert out_pl.shape == (batch_num, num_labels, hidden)
    assert jnp.allclose(out_pl, ref, atol=1e-6), "pallas (small) mismatch"

    # 3) Larger batch exercising lane-dense packing (P=4), a multi-step grid,
    #    and a partial trailing output block (rows % TB != 0).
    big_batch = 72  # rows = 72/4 = 18 -> TB = 16 -> grid = 2, last block partial
    out_big = jax.block_until_ready(
        label_embedding_forward(big_batch, table, force_pallas=True))
    ref_big = _reference(big_batch, table)
    assert out_big.shape == (big_batch, num_labels, hidden)
    assert jnp.allclose(out_big, ref_big, atol=1e-6), "pallas (big) mismatch"

    print("KERNEL_OK")
</pallas_src>

<mosaic_0001>
module attributes {stable_mosaic.version = 11 : i64} {
  func.func @_broadcast_kernel(%arg0: i32, %arg1: memref<1x96xf32, #tpu.memory_space<vmem>>, %arg2: memref<2x96xf32, #tpu.memory_space<vmem>>) attributes {dimension_semantics = [#tpu.dimension_semantics<parallel>], iteration_bounds = array<i64: 1>, scalar_prefetch = 0 : i64, scratch_operands = 0 : i64, tpu.core_type = #tpu.core_type<tc>, window_params = [{pipeline_mode = #tpu.pipeline_mode<synchronous>, transform_indices = @transform_0, window_bounds = array<i64: 1, 96>}, {transform_indices = @transform_1, window_bounds = array<i64: 2, 96>}]} {
    %c0 = arith.constant 0 : index
    %c0_0 = arith.constant 0 : index
    %0 = vector.load %arg1[%c0, %c0_0] : memref<1x96xf32, #tpu.memory_space<vmem>>, vector<1x96xf32>
    %1 = vector.shape_cast %0 : vector<1x96xf32> to vector<1x96xf32>
    %2 = vector.broadcast %1 : vector<1x96xf32> to vector<2x96xf32>
    %c0_1 = arith.constant 0 : index
    %c0_2 = arith.constant 0 : index
    %3 = vector.load %arg2[%c0_1, %c0_2] : memref<2x96xf32, #tpu.memory_space<vmem>>, vector<2x96xf32>
    tpu.vector_store %arg2[%c0_1, %c0_2], %2 {strides = array<i32>} : memref<2x96xf32, #tpu.memory_space<vmem>>, vector<2x96xf32>,
    return
  }
  func.func @transform_0(%arg0: i32) -> (i32, i32) {
    %c0_i32 = arith.constant 0 : i32
    %c0_i32_0 = arith.constant 0 : i32
    %c0_i32_1 = arith.constant 0 : i32
    return %c0_i32, %c0_i32_0 : i32, i32
  }
  func.func @transform_1(%arg0: i32) -> (i32, i32) {
    %c0_i32 = arith.constant 0 : i32
    %c0_i32_0 = arith.constant 0 : i32
    return %arg0, %c0_i32 : i32, i32
  }
}

</mosaic_0001>

<llo_original>
// kernel: tpu_custom_call.1
$region0: #{tpu_custom_call.1}
  #allocation0 [shape = 'u32[]', space=smem, size = 0x4, offset = 0x4, fixed_abs, tag = 'smem constant byte address 0x4 - core index']
  #allocation1 [shape = 'u32[144,128]{1,0:T(1,128)}', space=vmem, size = 0x12000, scoped, tag = 'internal scratch']
  %s0 = inlined_call_operand.hbm [shape: f32[1,96], index: 0, kind: input, shape index: {}]
  %s1 = inlined_call_operand.hbm [shape: f32[2,96], index: 1, kind: output, shape index: {}]
  %s2 = sld [smem:[#allocation0]]
  $region18: #{tpu_custom_call.1} parent=0
    _
  %s4 = ssub.s32 1, %s2
  %s5 = scalar_select 0, %s4, %s2
  $region1: #{tpu_custom_call.1} parent=0
    #allocation2 [shape = 'u8[512]{0}', space=vmem, size = 0x400, scoped, tag = 'input window, operand 0, single buffered']
    #allocation3 [shape = 's32[1]{0}', space=sflag, size = 0x4, scoped, tag = 'scoped memory for tpu_custom_call.1']
    #allocation4 [shape = 's32[1]{0}', space=sflag, size = 0x4, scoped, tag = 'scoped memory for tpu_custom_call.1']
    #allocation5 [shape = 'u8[1024]{0}', space=vmem, size = 0x400, scoped, tag = 'output window, operand 0, single buffered']
    %6 = vsyncpa [#allocation3], 0
    %7 = vsyncpa [#allocation4], 0
    // Predicated region
    $region2: #{tpu_custom_call.1} parent=1 // pred_check
      _
    $region3: #{tpu_custom_call.1} parent=1 // pred_check_branch
      %9 = sbr.rel (0) target = $region5
    $region4: #{tpu_custom_call.1} parent=1 // pred_region
      %s11 = ssub.s32 16, 16
      %12 = vsyncadd [#allocation3], %s11
      %s14 = sshll.u32 [#allocation2], 4
      %s15 = int_to_ptr.vmem [resolvable:$true] %s14
      %17 = dma.hbm_to_vmem [thread:$0]  %s0, 16, %s15, [#allocation3]
    $region5: #{tpu_custom_call.1} parent=1 // pred_fallthru
      _
    // Predicated region
    $region6: #{tpu_custom_call.1} parent=1 // pred_check
      _
    $region7: #{tpu_custom_call.1} parent=1 // pred_check_branch
      %19 = sbr.rel (0) target = $region9
    $region8: #{tpu_custom_call.1} parent=1 // pred_region
      %20 = dma.done [#allocation3], 16
    $region9: #{tpu_custom_call.1} parent=1 // pred_fallthru
      _
    %v21 = vld [vmem:[#allocation2] sm:$0x1]
    %v23 = vlaneseq
    %v24 = vshrl.u32 %v23, 7
    %v25 = vsub.s32 0, %v24
    %v26 = vrot.slane %v21, %v25
    %vm28 = vcmask 779264
    %29 = vst.msk [vmem:[#allocation5] sm:$0x3] %vm28, %v26
    // Predicated region
    $region10: #{tpu_custom_call.1} parent=1 // pred_check
      _
    $region11: #{tpu_custom_call.1} parent=1 // pred_check_branch
      %31 = sbr.rel (0) target = $region13
    $region12: #{tpu_custom_call.1} parent=1 // pred_region
      %s33 = ssub.s32 32, 32
      %34 = vsyncadd [#allocation4], %s33
      %s36 = sshll.u32 [#allocation5], 4
      %s37 = int_to_ptr.vmem [resolvable:$true] %s36
      %39 = dma.vmem_to_hbm [thread:$0]  %s37, 32, %s1, [#allocation4]
    $region13: #{tpu_custom_call.1} parent=1 // pred_fallthru
      _
    // Predicated region
    $region14: #{tpu_custom_call.1} parent=1 // pred_check
      _
    $region15: #{tpu_custom_call.1} parent=1 // pred_check_branch
      %41 = sbr.rel (0) target = $region17
    $region16: #{tpu_custom_call.1} parent=1 // pred_region
      %42 = dma.done [#allocation4], 32
    $region17: #{tpu_custom_call.1} parent=1 // pred_fallthru
      _
    %43 = vsyncpa [#allocation3], 1
    %44 = vsyncpa [#allocation4], 1

</llo_original>
